<compile_context>
chip_gen: v7x
topology: tpu7x:2x2x1
jax: 0.10.0
libtpu: 0.0.40
codegen_flags: <defaults>
</compile_context>

<pallas_src>
import jax
import jax.numpy as jnp
from jax.experimental import pallas as pl
from jax.experimental.pallas import tpu as pltpu


def _shift_kernel(x_ref, o_ref, carry_ref):
    # x_ref / o_ref: (1, TS, TD) VMEM tiles. carry_ref: (1, 1, TD) scratch that
    # persists across grid steps and holds the previous seq block's last row.
    si = pl.program_id(2)      # sequence-block index (innermost, sequential)
    ts = x_ref.shape[1]

    # Interior rows of the tile: out[s] = in[s - 1].
    o_ref[:, 1:, :] = x_ref[:, : ts - 1, :]

    # First row of the tile: zero for the global first seq block (F.pad's zero
    # row), otherwise the last row of the previous seq block (carried scratch).
    @pl.when(si == 0)
    def _zero_first_row():
        o_ref[:, 0:1, :] = jnp.zeros((1, 1, o_ref.shape[2]), dtype=o_ref.dtype)

    @pl.when(si > 0)
    def _halo_first_row():
        o_ref[:, 0:1, :] = carry_ref[...]

    # Stash this block's last input row for the next seq block of this (b, d).
    carry_ref[...] = x_ref[:, ts - 1 : ts, :]


def _pick_tiles(B, S, D, itemsize, budget_bytes):
    # Lane (hidden) tile: prefer the full hidden dim so every block DMA is one
    # contiguous (TS, D) HBM slab. Split only if a single row would blow the
    # per-block budget, or when B == 1 (give v7x's second TC a parallel block).
    if D * itemsize > budget_bytes:
        td = max(128, ((budget_bytes // itemsize) // 8 // 128) * 128)
        td = min(td, D)
    elif B == 1 and D % 256 == 0:
        td = D // 2
    else:
        td = D
    # Sequence tile: as many rows as fit the budget, multiple of 8 sublanes
    # (or the full sequence, which is always a legal block extent). Never
    # fall back to an unbounded (1, S, D) block.
    rows = max(1, budget_bytes // max(1, td * itemsize))
    if rows >= S:
        ts = S
    else:
        ts = max(8, (rows // 8) * 8)
    return ts, td


def convulation_forward(tokens, *, min_pallas_bytes=8 << 20,
                        block_budget_bytes=2 << 20):
    """tokens: (B, S, D) -> equivalent of F.pad(tokens[:, :-1], (0,0,1,0))."""
    B, S, D = tokens.shape
    itemsize = jnp.dtype(tokens.dtype).itemsize
    total_bytes = B * S * D * itemsize

    # Small-input / degenerate fallback: XLA's fused pad/slice already runs at
    # the HBM roofline; don't pay pallas_call launch + per-step overhead.
    if S <= 1 or total_bytes < min_pallas_bytes:
        return jnp.pad(tokens[:, : S - 1], ((0, 0), (1, 0), (0, 0)))

    ts, td = _pick_tiles(B, S, D, itemsize, block_budget_bytes)
    grid = (B, pl.cdiv(D, td), pl.cdiv(S, ts))

    return pl.pallas_call(
        _shift_kernel,
        out_shape=jax.ShapeDtypeStruct((B, S, D), tokens.dtype),
        grid_spec=pltpu.PrefetchScalarGridSpec(
            num_scalar_prefetch=0,
            grid=grid,
            in_specs=[pl.BlockSpec((1, ts, td), lambda b, d, s: (b, s, d))],
            out_specs=pl.BlockSpec((1, ts, td), lambda b, d, s: (b, s, d)),
            scratch_shapes=[pltpu.VMEM((1, 1, td), tokens.dtype)],
        ),
        compiler_params=pltpu.CompilerParams(
            dimension_semantics=("parallel", "parallel", "arbitrary"),
            vmem_limit_bytes=32 * 1024 * 1024,
        ),
        cost_estimate=pl.CostEstimate(
            flops=0,
            transcendentals=0,
            bytes_accessed=2 * total_bytes,
        ),
    )(tokens)


if __name__ == "__main__":
    key0, key1 = jax.random.split(jax.random.PRNGKey(0))

    def ref_shift(t):
        return jnp.pad(t[:, :-1], ((0, 0), (1, 0), (0, 0)))

    # Small shape consistent with the module: batch=2, seq=8, hidden=256.
    B, S, D = 2, 8, 256
    tokens = jax.random.normal(key0, (B, S, D), dtype=jnp.float32)

    # Force the Pallas path (single seq block at this size).
    out = jax.block_until_ready(convulation_forward(tokens, min_pallas_bytes=0))
    assert out.shape == tokens.shape and out.dtype == tokens.dtype
    assert jnp.allclose(out, ref_shift(tokens)), "Pallas single-block path mismatch"

    # Seq-tiled path: a tiny per-block budget forces 4 sequence blocks of 16
    # rows, exercising the cross-block carry scratch.
    tokens2 = jax.random.normal(key1, (2, 64, 128), dtype=jnp.float32)
    out2 = jax.block_until_ready(
        convulation_forward(tokens2, min_pallas_bytes=0,
                            block_budget_bytes=16 * 128 * 4))
    assert jnp.allclose(out2, ref_shift(tokens2)), "Pallas seq-tiled path mismatch"

    # Default dispatch for tiny inputs: XLA fused pad/slice fallback.
    out_fb = jax.block_until_ready(convulation_forward(tokens))
    assert jnp.allclose(out_fb, ref_shift(tokens)), "fallback path mismatch"

    print("KERNEL_OK")
</pallas_src>

<mosaic_0001>
module attributes {stable_mosaic.version = 11 : i64} {
  func.func @_shift_kernel(%arg0: i32, %arg1: i32, %arg2: i32, %arg3: memref<1x8x256xf32, #tpu.memory_space<vmem>>, %arg4: memref<1x8x256xf32, #tpu.memory_space<vmem>>, %arg5: memref<1x1x256xf32, #tpu.memory_space<vmem>>) attributes {dimension_semantics = [#tpu.dimension_semantics<parallel>, #tpu.dimension_semantics<parallel>, #tpu.dimension_semantics<arbitrary>], iteration_bounds = array<i64: 2, 1, 1>, scalar_prefetch = 0 : i64, scratch_operands = 1 : i64, tpu.core_type = #tpu.core_type<tc>, window_params = [{transform_indices = @transform_0, window_bounds = array<i64: 1, 8, 256>}, {transform_indices = @transform_1, window_bounds = array<i64: 1, 8, 256>}]} {
    %c0 = arith.constant 0 : index
    %c0_0 = arith.constant 0 : index
    %c0_1 = arith.constant 0 : index
    %0 = vector.load %arg3[%c0, %c0_0, %c0_1] : memref<1x8x256xf32, #tpu.memory_space<vmem>>, vector<1x7x256xf32>
    %c0_2 = arith.constant 0 : index
    %c1 = arith.constant 1 : index
    %c0_3 = arith.constant 0 : index
    %1 = vector.load %arg4[%c0_2, %c1, %c0_3] : memref<1x8x256xf32, #tpu.memory_space<vmem>>, vector<1x7x256xf32>
    tpu.vector_store %arg4[%c0_2, %c1, %c0_3], %0 {strides = array<i32>} : memref<1x8x256xf32, #tpu.memory_space<vmem>>, vector<1x7x256xf32>,
    %c0_i32 = arith.constant 0 : i32
    %2 = arith.cmpi eq, %arg2, %c0_i32 : i32
    %3 = arith.extui %2 : i1 to i32
    %c0_i32_4 = arith.constant 0 : i32
    %4 = arith.cmpi ne, %3, %c0_i32_4 : i32
    scf.if %4 {
      %cst = arith.constant 0.000000e+00 : f32
      %10 = vector.broadcast %cst : f32 to vector<1x1x256xf32>
      %c0_12 = arith.constant 0 : index
      %c0_13 = arith.constant 0 : index
      %c0_14 = arith.constant 0 : index
      %11 = vector.load %arg4[%c0_12, %c0_13, %c0_14] : memref<1x8x256xf32, #tpu.memory_space<vmem>>, vector<1x1x256xf32>
      tpu.vector_store %arg4[%c0_12, %c0_13, %c0_14], %10 {strides = array<i32>} : memref<1x8x256xf32, #tpu.memory_space<vmem>>, vector<1x1x256xf32>,
    } else {
    }
    %c0_i32_5 = arith.constant 0 : i32
    %5 = arith.cmpi sgt, %arg2, %c0_i32_5 : i32
    %6 = arith.extui %5 : i1 to i32
    %c0_i32_6 = arith.constant 0 : i32
    %7 = arith.cmpi ne, %6, %c0_i32_6 : i32
    scf.if %7 {
      %c0_12 = arith.constant 0 : index
      %c0_13 = arith.constant 0 : index
      %c0_14 = arith.constant 0 : index
      %10 = vector.load %arg5[%c0_12, %c0_13, %c0_14] : memref<1x1x256xf32, #tpu.memory_space<vmem>>, vector<1x1x256xf32>
      %c0_15 = arith.constant 0 : index
      %c0_16 = arith.constant 0 : index
      %c0_17 = arith.constant 0 : index
      %11 = vector.load %arg4[%c0_15, %c0_16, %c0_17] : memref<1x8x256xf32, #tpu.memory_space<vmem>>, vector<1x1x256xf32>
      tpu.vector_store %arg4[%c0_15, %c0_16, %c0_17], %10 {strides = array<i32>} : memref<1x8x256xf32, #tpu.memory_space<vmem>>, vector<1x1x256xf32>,
    } else {
    }
    %c0_7 = arith.constant 0 : index
    %c7 = arith.constant 7 : index
    %c0_8 = arith.constant 0 : index
    %8 = vector.load %arg3[%c0_7, %c7, %c0_8] : memref<1x8x256xf32, #tpu.memory_space<vmem>>, vector<1x1x256xf32>
    %c0_9 = arith.constant 0 : index
    %c0_10 = arith.constant 0 : index
    %c0_11 = arith.constant 0 : index
    %9 = vector.load %arg5[%c0_9, %c0_10, %c0_11] : memref<1x1x256xf32, #tpu.memory_space<vmem>>, vector<1x1x256xf32>
    tpu.vector_store %arg5[%c0_9, %c0_10, %c0_11], %8 {strides = array<i32>} : memref<1x1x256xf32, #tpu.memory_space<vmem>>, vector<1x1x256xf32>,
    return
  }
  func.func @transform_0(%arg0: i32, %arg1: i32, %arg2: i32) -> (i32, i32, i32) {
    %c0_i32 = arith.constant 0 : i32
    return %arg0, %arg2, %arg1 : i32, i32, i32
  }
  func.func @transform_1(%arg0: i32, %arg1: i32, %arg2: i32) -> (i32, i32, i32) {
    %c0_i32 = arith.constant 0 : i32
    return %arg0, %arg2, %arg1 : i32, i32, i32
  }
}

</mosaic_0001>

<llo_original>
// kernel: tpu_custom_call.1
$region0: #{tpu_custom_call.1}
  #allocation0 [shape = 'u32[]', space=smem, size = 0x4, offset = 0x4, fixed_abs, tag = 'smem constant byte address 0x4 - core index']
  #allocation1 [shape = 'u32[144,128]{1,0:T(1,128)}', space=vmem, size = 0x12000, scoped, tag = 'internal scratch']
  #allocation2 [shape = 'f32[1,1,256]{2,1,0:T(1,128)}', space=vmem, size = 0x400, scoped, tag = 'scratch operand']
  %s0 = inlined_call_operand.hbm [shape: f32[2,8,256], index: 0, kind: input, shape index: {}]
  %s1 = inlined_call_operand.hbm [shape: f32[2,8,256], index: 1, kind: output, shape index: {}]
  %s2 = sld [smem:[#allocation0]]
  $region49: #{tpu_custom_call.1} parent=0
    _
  %s4 = ssub.s32 1, %s2
  %s5 = scalar_select 0, %s4, %s2
  $region1: #{tpu_custom_call.1} parent=0
    #allocation3 [shape = 'u8[16384]{0}', space=vmem, size = 0x4000, scoped, tag = 'input window, operand 0']
    #allocation4 [shape = 's32[2]{0}', space=sflag, size = 0x8, scoped, tag = 'scoped memory for tpu_custom_call.1']
    #allocation5 [shape = 's32[2]{0}', space=sflag, size = 0x8, scoped, tag = 'scoped memory for tpu_custom_call.1']
    #allocation6 [shape = 'u8[16384]{0}', space=vmem, size = 0x4000, scoped, tag = 'output window, operand 0']
    %6 = vsyncpa [#allocation4], 0
    %s7 = scalar_lea.sflag [#allocation4], 1
    %8 = vsyncpa %s7, 0
    %9 = vsyncpa [#allocation5], 0
    %s10 = scalar_lea.sflag [#allocation5], 1
    %11 = vsyncpa %s10, 0
    loop: start=0, step=1, limit=4
    $region2: #{tpu_custom_call.1} parent=1 // loop_pre_header
      _
    $region3: #{tpu_custom_call.1} parent=1 // loop_header
      %s13 = sphi 0, %s17
      %p14 = scmp.ge.s32.totalorder %s13, 4
      %s20 = sphi 0, %s39
      %s21 = sphi 0, %s35
      %s22 = sphi 0, %s31
      %s23 = sphi 0, %s20
      %s24 = sphi 0, %s21
      %s25 = sphi 0, %s22
      %s26 = sphi 0, %s23
      %s27 = sphi 0, %s24
      %s28 = sphi 0, %s25
      %s46 = sphi 0, %s48
      %s49 = sphi 0, %s46
      %s50 = sphi 0, %s49
      %s66 = sphi 0, %s50
      %s76 = sphi 0, %s78
      %s79 = sphi 0, %s76
      %s80 = sphi 0, %s79
      %s96 = sphi 0, %s80
    $region4: #{tpu_custom_call.1} parent=1 // loop_header_branch
      %16 = sbr.rel (%p14) target = $region8
    $region5: #{tpu_custom_call.1} parent=1 // loop_body
      %s18 = ssub.s32 %s13, 1
      %s19 = ssub.s32 %s13, 2
      %s29 = sadd.s32 1, %s22
      %p30 = scmp.ge.s32.totalorder %s29, 1
      %s31 = scalar_select %p30, 0, %s29
      %s32 = sadd.s32 1, %s21
      %s33 = scalar_select %p30, %s32, %s21
      %p34 = scmp.ge.s32.totalorder %s33, 1
      %s35 = scalar_select %p34, 0, %s33
      %s36 = sadd.s32 1, %s20
      %s37 = scalar_select %p34, %s36, %s20
      %p38 = scmp.ge.s32.totalorder %s37, 2
      %s39 = scalar_select %p38, 0, %s37
      %s40 = ssub.s32 %s20, %s39
      %s41 = ssub.s32 %s22, %s31
      %s42 = sor.u32 %s40, %s41
      %s43 = ssub.s32 %s21, %s35
      %s44 = sor.u32 %s42, %s43
      %p45 = scmp.eq.s32.totalorder %s44, 0
      %s47 = sadd.s32 %s46, 1
      %s48 = scalar_select %p45, %s46, %s47
      %p51 = pneg %p45
      %p52 = scmp.eq.s32.totalorder %s13, 1
      %p53 = por %p51, %p52
      %p54 = scmp.ne.s32.totalorder %s46, %s49
      %p55 = scmp.eq.s32.totalorder %s13, 0
      %p56 = por %p54, %p55
      %p57 = scmp.ne.s32.totalorder %s46, %s49
      %p58 = scmp.eq.s32.totalorder %s18, 1
      %p59 = por %p57, %p58
      %p60 = scmp.ne.s32.totalorder %s49, %s50
      %p61 = scmp.eq.s32.totalorder %s18, 0
      %p62 = por %p60, %p61
      %p63 = scmp.ne.s32.totalorder %s49, %s50
      %p64 = scmp.eq.s32.totalorder %s19, 1
      %p65 = por %p63, %p64
      %p67 = scmp.ne.s32.totalorder %s50, %s66
      %p68 = scmp.eq.s32.totalorder %s19, 0
      %p69 = por %p67, %p68
      %s70 = ssub.s32 %s20, %s39
      %s71 = ssub.s32 %s22, %s31
      %s72 = sor.u32 %s70, %s71
      %s73 = ssub.s32 %s21, %s35
      %s74 = sor.u32 %s72, %s73
      %p75 = scmp.eq.s32.totalorder %s74, 0
      %s77 = sadd.s32 %s76, 1
      %s78 = scalar_select %p75, %s76, %s77
      %p81 = pneg %p75
      %p82 = scmp.eq.s32.totalorder %s13, 1
      %p83 = por %p81, %p82
      %p84 = scmp.ne.s32.totalorder %s76, %s79
      %p85 = scmp.eq.s32.totalorder %s13, 0
      %p86 = por %p84, %p85
      %p87 = scmp.ne.s32.totalorder %s76, %s79
      %p88 = scmp.eq.s32.totalorder %s18, 1
      %p89 = por %p87, %p88
      %p90 = scmp.ne.s32.totalorder %s79, %s80
      %p91 = scmp.eq.s32.totalorder %s18, 0
      %p92 = por %p90, %p91
      %p93 = scmp.ne.s32.totalorder %s79, %s80
      %p94 = scmp.eq.s32.totalorder %s19, 1
      %p95 = por %p93, %p94
      %p97 = scmp.ne.s32.totalorder %s80, %s96
      %p98 = scmp.eq.s32.totalorder %s19, 0
      %p99 = por %p97, %p98
      %p100 = scmp.le.s32.totalorder 1, %s13
      %p101 = scmp.lt.s32.totalorder %s13, 3
      %p102 = pnand %p100, %p101
      %p103 = pneg %p102
      // Predicated region
      $region9: #{tpu_custom_call.1} parent=5 // pred_check
        _
      $region10: #{tpu_custom_call.1} parent=5 // pred_check_branch
        %105 = sbr.rel (%p102) target = $region12
      $region11: #{tpu_custom_call.1} parent=5 // pred_region
        %s106 = ssub.s32 %s13, 1
      $region12: #{tpu_custom_call.1} parent=5 // pred_fallthru
        _
      %p107 = scmp.lt.s32.totalorder %s13, 2
      // Predicated region
      $region13: #{tpu_custom_call.1} parent=5 // pred_check
        %p108 = pneg %p107
      $region14: #{tpu_custom_call.1} parent=5 // pred_check_branch
        %110 = sbr.rel (%p108) target = $region16
      $region15: #{tpu_custom_call.1} parent=5 // pred_region
        // Predicated region
        $region17: #{tpu_custom_call.1} parent=15 // pred_check
          %p111 = pneg %p56
        $region18: #{tpu_custom_call.1} parent=15 // pred_check_branch
          %113 = sbr.rel (%p111) target = $region20
        $region19: #{tpu_custom_call.1} parent=15 // pred_region
          %s114 = sand.u32 %s46, 1
          %s115 = scalar_lea.sflag [#allocation4], %s114
          %s116 = sand.u32 %s46, 1
          %s117 = smul.addr %s116, 16
          %s118 = scalar_lea.vmem [#allocation3], %s117
          %s119 = smul.u32 2, %s21
          %s121 = ssub.s32 256, 256
          %122 = vsyncadd %s115, %s121
          %s123 = smul.addr %s22, 2
          %s124 = sadd.s32 %s119, %s123
          %s125 = smul.addr %s20, 2
          %s126 = sadd.s32 %s124, %s125
          %s127 = smul.addr %s126, 128
          %s128 = scalar_lea.hbm %s0, %s127
          %s130 = sshll.u32 %s118, 4
          %s131 = int_to_ptr.vmem [resolvable:$true] %s130
          %133 = dma.hbm_to_vmem [thread:$0]  %s128, 256, %s131, %s115
        $region20: #{tpu_custom_call.1} parent=15 // pred_fallthru
          _
      $region16: #{tpu_custom_call.1} parent=5 // pred_fallthru
        _
      %p134 = scmp.le.s32.totalorder 1, %s13
      %p135 = scmp.lt.s32.totalorder %s13, 3
      %p136 = pnand %p134, %p135
      %p137 = pneg %p136
      // Predicated region
      $region21: #{tpu_custom_call.1} parent=5 // pred_check
        _
      $region22: #{tpu_custom_call.1} parent=5 // pred_check_branch
        %139 = sbr.rel (%p136) target = $region24
      $region23: #{tpu_custom_call.1} parent=5 // pred_region
        %s140 = ssub.s32 %s13, 1
        %s141 = sand.u32 %s49, 1
        %s142 = scalar_lea.sflag [#allocation4], %s141
        %s143 = sand.u32 %s49, 1
        %s144 = smul.addr %s143, 16
        %s145 = scalar_lea.vmem [#allocation3], %s144
        // Predicated region
        $region25: #{tpu_custom_call.1} parent=23 // pred_check
          %p146 = pneg %p62
        $region26: #{tpu_custom_call.1} parent=23 // pred_check_branch
          %148 = sbr.rel (%p146) target = $region28
        $region27: #{tpu_custom_call.1} parent=23 // pred_region
          %149 = dma.done %s142, 256
        $region28: #{tpu_custom_call.1} parent=23 // pred_fallthru
          _
        %s150 = sand.u32 %s49, 1
        %s151 = scalar_lea.sflag [#allocation4], %s150
        %s152 = sand.u32 %s49, 1
        %s153 = smul.addr %s152, 16
        %s154 = scalar_lea.vmem [#allocation3], %s153
        %p155 = pneg %p62
        %p156 = pneg %p59
        %p157 = pneg %p92
        %p158 = pneg %p89
        %s159 = sand.u32 %s79, 1
        %s160 = scalar_lea.sflag [#allocation5], %s159
        %s161 = sand.u32 %s79, 1
        %s162 = smul.addr %s161, 16
        %s163 = scalar_lea.vmem [#allocation6], %s162
        %s164 = smul.u32 2, %s24
        %s165 = smul.u32 2, %s24
        %v166 = vld [vmem:[%s145] sm:$0x7f]
        %v167 = vld [vmem:[%s145 + $0x8] sm:$0x7f]
        %v170 = vrot.slane %v166, 7
        %v171 = vrot.slane %v167, 7
        %174 = vst [vmem:[%s163] sm:$0xfe] %v170
        %175 = vst [vmem:[%s163 + $0x8] sm:$0xfe] %v171
        %p176 = scmp.eq.s32.totalorder %s25, 0
        // Predicated region
        $region29: #{tpu_custom_call.1} parent=23 // pred_check
          %p177 = pneg %p176
        $region30: #{tpu_custom_call.1} parent=23 // pred_check_branch
          %179 = sbr.rel (%p177) target = $region32
        $region31: #{tpu_custom_call.1} parent=23 // pred_region
          %v180 = vlaneseq
          %vm181 = vcmp.ge.s32.totalorder %v180, 0
          %vm182 = vcmp.lt.s32.totalorder %v180, 256
          %vm183 = vmand %vm181, %vm182
          %184 = vst.msk [vmem:[%s163] ss:$8 sm:$0x3] %vm183, 0.0
          %185 = vst.msk [vmem:[%s163] ss:$8 sm:$0x0] %vm183, 0.0
        $region32: #{tpu_custom_call.1} parent=23 // pred_fallthru
          _
        %p186 = scmp.gt.s32.totalorder %s25, 0
        // Predicated region
        $region33: #{tpu_custom_call.1} parent=23 // pred_check
          %p187 = pneg %p186
        $region34: #{tpu_custom_call.1} parent=23 // pred_check_branch
          %189 = sbr.rel (%p187) target = $region36
        $region35: #{tpu_custom_call.1} parent=23 // pred_region
          %v190 = vld [vmem:[#allocation2] sm:$0x3]
          %v191 = vlaneseq
          %vm192 = vcmp.ge.s32.totalorder %v191, 0
          %vm193 = vcmp.lt.s32.totalorder %v191, 256
          %vm194 = vmand %vm192, %vm193
          %195 = vst.msk [vmem:[%s163] ss:$8 sm:$0x3] %vm194, %v190
          %196 = vst.msk [vmem:[%s163] ss:$8 sm:$0x0] %vm194, %v190
        $region36: #{tpu_custom_call.1} parent=23 // pred_fallthru
          _
        %s197 = scalar_lea.vmem %s145, 7 [#allocation3]
        %v198 = vld [vmem:[%s197] ss:$8 sm:$0x3]
        %v199 = vlaneseq
        %vm200 = vcmp.ge.s32.totalorder %v199, 0
        %vm201 = vcmp.lt.s32.totalorder %v199, 256
        %vm202 = vmand %vm200, %vm201
        %203 = vst.msk [vmem:[#allocation2] sm:$0x3] %vm202, %v198
        %s204 = sand.u32 %s79, 1
        %s205 = scalar_lea.sflag [#allocation5], %s204
        %s206 = sand.u32 %s79, 1
        %s207 = smul.addr %s206, 16
        %s208 = scalar_lea.vmem [#allocation6], %s207
        // Predicated region
        $region37: #{tpu_custom_call.1} parent=23 // pred_check
          %p209 = pneg %p89
        $region38: #{tpu_custom_call.1} parent=23 // pred_check_branch
          %211 = sbr.rel (%p209) target = $region40
        $region39: #{tpu_custom_call.1} parent=23 // pred_region
          %s212 = smul.u32 2, %s24
          %s214 = ssub.s32 256, 256
          %215 = vsyncadd %s205, %s214
          %s216 = smul.addr %s25, 2
          %s217 = sadd.s32 %s212, %s216
          %s218 = smul.addr %s23, 2
          %s219 = sadd.s32 %s217, %s218
          %s220 = smul.addr %s219, 128
          %s221 = scalar_lea.hbm %s1, %s220
          %s223 = sshll.u32 %s208, 4
          %s224 = int_to_ptr.vmem [resolvable:$true] %s223
          %226 = dma.vmem_to_hbm [thread:$0]  %s224, 256, %s221, %s205
        $region40: #{tpu_custom_call.1} parent=23 // pred_fallthru
          _
      $region24: #{tpu_custom_call.1} parent=5 // pred_fallthru
        _
      %p227 = scmp.le.s32.totalorder 2, %s13
      // Predicated region
      $region41: #{tpu_custom_call.1} parent=5 // pred_check
        %p228 = pneg %p227
      $region42: #{tpu_custom_call.1} parent=5 // pred_check_branch
        %230 = sbr.rel (%p228) target = $region44
      $region43: #{tpu_custom_call.1} parent=5 // pred_region
        %s231 = ssub.s32 %s13, 2
        // Predicated region
        $region45: #{tpu_custom_call.1} parent=43 // pred_check
          %p232 = pneg %p95
        $region46: #{tpu_custom_call.1} parent=43 // pred_check_branch
          %234 = sbr.rel (%p232) target = $region48
        $region47: #{tpu_custom_call.1} parent=43 // pred_region
          %s235 = sand.u32 %s80, 1
          %s236 = scalar_lea.sflag [#allocation5], %s235
          %s237 = sand.u32 %s80, 1
          %s238 = smul.addr %s237, 16
          %s239 = scalar_lea.vmem [#allocation6], %s238
          %240 = dma.done %s236, 256
        $region48: #{tpu_custom_call.1} parent=43 // pred_fallthru
          _
      $region44: #{tpu_custom_call.1} parent=5 // pred_fallthru
        _
    $region6: #{tpu_custom_call.1} parent=1 // loop_footer
      %s17 = sadd.s32 1, %s13
    $region7: #{tpu_custom_call.1} parent=1 // loop_footer_branch
      %12 = sbr.rel target = $region3
    $region8: #{tpu_custom_call.1} parent=1 // loop_exit
      _
    %241 = vsyncpa [#allocation4], 1
    %s242 = scalar_lea.sflag [#allocation4], 1
    %243 = vsyncpa %s242, 1
    %244 = vsyncpa [#allocation5], 1
    %s245 = scalar_lea.sflag [#allocation5], 1
    %246 = vsyncpa %s245, 1

</llo_original>
